<compile_context>
chip_gen: v7x
topology: tpu7x:2x2x1
jax: 0.10.0
libtpu: 0.0.40
codegen_flags: <defaults>
</compile_context>

<pallas_src>
import math
from functools import partial

import jax
import jax.numpy as jnp
from jax.experimental import pallas as pl
from jax.experimental.pallas import tpu as pltpu

# Make the pure-JAX reference and the in-kernel f32 matmuls use the same
# (full f32) precision so the correctness check is tight.
jax.config.update("jax_default_matmul_precision", "highest")


# ----------------------------------------------------------------------------
# helpers
# ----------------------------------------------------------------------------
def _round_up(x, m):
    return (x + m - 1) // m * m


def _pad_rows(x2d, m_pad):
    m = x2d.shape[0]
    if m_pad == m:
        return x2d
    return jnp.pad(x2d, ((0, m_pad - m), (0, 0)))


def _row_tile(m, target):
    """Row tile: as large as possible (perf feedback #1) but 8-aligned and
    never larger than the (padded) row count."""
    return min(target, _round_up(m, 8))


# ----------------------------------------------------------------------------
# Kernel 1: fused MLP  (fc1 -> GELU -> fc2)  -- perf-review target
# ----------------------------------------------------------------------------
_GELU_CONST = 1.0 / math.sqrt(2.0)


def _mlp_kernel(x_ref, w1_ref, b1_ref, w2_ref, b2_ref, o_ref, acc_ref):
    k = pl.program_id(1)

    @pl.when(k == 0)
    def _():
        acc_ref[...] = jnp.zeros_like(acc_ref)

    # fc1 on this hidden chunk: operands feed the MXU in their native dtype,
    # f32 accumulation via preferred_element_type (no .astype upcasts).
    h = jnp.dot(x_ref[...], w1_ref[...], preferred_element_type=jnp.float32)
    h = h + b1_ref[...].astype(jnp.float32)

    # exact erf-form GELU (PyTorch nn.GELU default); math kept in f32.
    h = 0.5 * h * (1.0 + jax.lax.erf(h * _GELU_CONST))

    # dropout(p) is identity at inference time.

    # fc2 on this hidden chunk, accumulated into the f32 VMEM scratch.
    acc_ref[...] += jnp.dot(h.astype(w2_ref.dtype), w2_ref[...],
                            preferred_element_type=jnp.float32)

    @pl.when(k == pl.num_programs(1) - 1)
    def _():
        o_ref[...] = (acc_ref[...] + b2_ref[...].astype(jnp.float32)).astype(o_ref.dtype)


def _pick_h_chunk(h, target=512):
    for c in (target, 256, 128):
        if c <= h and h % c == 0:
            return c
    return h


_SINGLE_BUFFER_OK = None  # tri-state: None = not yet probed on this runtime


def _mlp_call(x2, w1, b1, w2, b2, *, tm, th, single_buffer):
    m_pad, c_in = x2.shape
    hidden = w1.shape[1]
    c_out = w2.shape[1]
    n_k = hidden // th

    def const_spec(shape):
        # index never changes over the grid -> a single VMEM buffer is enough
        # (halves the reserved weight footprint; perf feedback #6).
        if single_buffer and hasattr(pl, "Buffered"):
            return pl.BlockSpec(shape, lambda i, k: (0, 0),
                                pipeline_mode=pl.Buffered(1))
        return pl.BlockSpec(shape, lambda i, k: (0, 0))

    if n_k == 1:
        w1_spec = const_spec((c_in, th))
        b1_spec = const_spec((1, th))
        w2_spec = const_spec((th, c_out))
    else:
        w1_spec = pl.BlockSpec((c_in, th), lambda i, k: (0, k))
        b1_spec = pl.BlockSpec((1, th), lambda i, k: (0, k))
        w2_spec = pl.BlockSpec((th, c_out), lambda i, k: (k, 0))
    b2_spec = const_spec((1, c_out))

    itemsize = x2.dtype.itemsize
    vmem_est = (2 * tm * c_in * itemsize            # x tile (double buffered)
                + 2 * tm * c_out * itemsize         # out tile
                + 2 * (c_in * th + th + th * c_out + c_out) * itemsize  # weights
                + tm * c_out * 4)                   # f32 accumulator
    vmem_limit = int(min(max(2 * vmem_est, 32 * 1024 * 1024), 64 * 1024 * 1024))

    flops = 2 * m_pad * (c_in * hidden + hidden * c_out)
    bytes_accessed = itemsize * (m_pad * c_in + c_in * hidden + hidden
                                 + hidden * c_out + c_out + m_pad * c_out)

    return pl.pallas_call(
        _mlp_kernel,
        out_shape=jax.ShapeDtypeStruct((m_pad, c_out), x2.dtype),
        grid_spec=pltpu.PrefetchScalarGridSpec(
            num_scalar_prefetch=0,
            grid=(m_pad // tm, n_k),
            in_specs=[
                pl.BlockSpec((tm, c_in), lambda i, k: (i, 0)),
                w1_spec, b1_spec, w2_spec, b2_spec,
            ],
            out_specs=pl.BlockSpec((tm, c_out), lambda i, k: (i, 0)),
            scratch_shapes=[pltpu.VMEM((tm, c_out), jnp.float32)],
        ),
        compiler_params=pltpu.CompilerParams(
            dimension_semantics=("parallel", "arbitrary"),
            vmem_limit_bytes=vmem_limit),
        cost_estimate=pl.CostEstimate(flops=int(flops),
                                      transcendentals=int(m_pad * hidden),
                                      bytes_accessed=int(bytes_accessed)),
    )(x2, w1, b1.reshape(1, hidden), w2, b2.reshape(1, c_out))


def mlp_pallas(x, w1, b1, w2, b2, *, tm=256, th=512):
    """y = fc2(GELU(fc1(x))), x: (..., C_in); weights stored (in, out)."""
    global _SINGLE_BUFFER_OK
    orig_shape = x.shape
    c_in = orig_shape[-1]
    c_out = w2.shape[1]
    x2 = x.reshape(-1, c_in)
    m = x2.shape[0]
    tm = _row_tile(m, tm)               # tm=256 target, clipped to row count
    m_pad = _round_up(m, tm)            # remainder rows handled by padding
    x2 = _pad_rows(x2, m_pad)
    th = _pick_h_chunk(w1.shape[1], th)

    if _SINGLE_BUFFER_OK is None:
        try:
            out = _mlp_call(x2, w1, b1, w2, b2, tm=tm, th=th, single_buffer=True)
            jax.block_until_ready(out)
            _SINGLE_BUFFER_OK = True
        except Exception:       # pipeline_mode / Buffered(1) unsupported: fall back
            _SINGLE_BUFFER_OK = False
            out = _mlp_call(x2, w1, b1, w2, b2, tm=tm, th=th, single_buffer=False)
    else:
        out = _mlp_call(x2, w1, b1, w2, b2, tm=tm, th=th,
                        single_buffer=_SINGLE_BUFFER_OK)
    return out[:m].reshape(orig_shape[:-1] + (c_out,))


# ----------------------------------------------------------------------------
# Kernel 2: Linear (+ optional tanh / sigmoid)
# ----------------------------------------------------------------------------
def _linear_kernel(x_ref, w_ref, b_ref, o_ref, *, act):
    x = x_ref[...]
    w = w_ref[...]
    if x.shape[-1] == 1:
        # degenerate K=1 contraction (clinic 1->dim embedding): plain broadcast
        y = x.astype(jnp.float32) * w.astype(jnp.float32)
    else:
        y = jnp.dot(x, w, preferred_element_type=jnp.float32)
    y = y + b_ref[...].astype(jnp.float32)
    if act == "tanh":
        y = jnp.tanh(y)
    elif act == "sigmoid":
        y = jax.nn.sigmoid(y)
    o_ref[...] = y.astype(o_ref.dtype)


def linear_pallas(x, w, b, *, act="none", tm=256):
    orig_shape = x.shape
    c_in = orig_shape[-1]
    c_out = w.shape[1]
    x2 = x.reshape(-1, c_in)
    m = x2.shape[0]
    tm = _row_tile(m, tm)
    m_pad = _round_up(m, tm)
    x2 = _pad_rows(x2, m_pad)
    flops = 2 * m_pad * c_in * c_out
    bytes_accessed = 4 * (m_pad * c_in + c_in * c_out + c_out + m_pad * c_out)
    out = pl.pallas_call(
        partial(_linear_kernel, act=act),
        out_shape=jax.ShapeDtypeStruct((m_pad, c_out), x.dtype),
        grid_spec=pltpu.PrefetchScalarGridSpec(
            num_scalar_prefetch=0,
            grid=(m_pad // tm,),
            in_specs=[
                pl.BlockSpec((tm, c_in), lambda i: (i, 0)),
                pl.BlockSpec((c_in, c_out), lambda i: (0, 0)),
                pl.BlockSpec((1, c_out), lambda i: (0, 0)),
            ],
            out_specs=pl.BlockSpec((tm, c_out), lambda i: (i, 0)),
        ),
        compiler_params=pltpu.CompilerParams(dimension_semantics=("parallel",)),
        cost_estimate=pl.CostEstimate(
            flops=int(flops),
            transcendentals=int(m_pad * c_out if act != "none" else 0),
            bytes_accessed=int(bytes_accessed)),
    )(x2, w, b.reshape(1, c_out))
    return out[:m].reshape(orig_shape[:-1] + (c_out,))


# ----------------------------------------------------------------------------
# Kernel 3: LayerNorm
# ----------------------------------------------------------------------------
def _ln_kernel(x_ref, g_ref, b_ref, o_ref, *, eps):
    x = x_ref[...].astype(jnp.float32)
    mu = jnp.mean(x, axis=-1, keepdims=True)
    xc = x - mu
    var = jnp.mean(xc * xc, axis=-1, keepdims=True)
    y = xc * jax.lax.rsqrt(var + eps)
    y = y * g_ref[...].astype(jnp.float32) + b_ref[...].astype(jnp.float32)
    o_ref[...] = y.astype(o_ref.dtype)


def layernorm_pallas(x, gamma, beta, *, eps=1e-5, tm=256):
    orig_shape = x.shape
    c = orig_shape[-1]
    x2 = x.reshape(-1, c)
    m = x2.shape[0]
    tm = _row_tile(m, tm)
    m_pad = _round_up(m, tm)
    x2 = _pad_rows(x2, m_pad)
    out = pl.pallas_call(
        partial(_ln_kernel, eps=eps),
        out_shape=jax.ShapeDtypeStruct((m_pad, c), x.dtype),
        grid_spec=pltpu.PrefetchScalarGridSpec(
            num_scalar_prefetch=0,
            grid=(m_pad // tm,),
            in_specs=[
                pl.BlockSpec((tm, c), lambda i: (i, 0)),
                pl.BlockSpec((1, c), lambda i: (0, 0)),
                pl.BlockSpec((1, c), lambda i: (0, 0)),
            ],
            out_specs=pl.BlockSpec((tm, c), lambda i: (i, 0)),
        ),
        compiler_params=pltpu.CompilerParams(dimension_semantics=("parallel",)),
    )(x2, gamma.reshape(1, c), beta.reshape(1, c))
    return out[:m].reshape(orig_shape)


# ----------------------------------------------------------------------------
# Kernel 4: per-head attention (scores -> softmax -> weighted sum)
# ----------------------------------------------------------------------------
def _attn_kernel(q_ref, k_ref, v_ref, o_ref, *, scale):
    q = q_ref[...].astype(jnp.float32)          # (Nq, hd)
    k = k_ref[...].astype(jnp.float32)          # (Nk, hd)
    v = v_ref[...]                              # (Nk, hd)
    s = jax.lax.dot_general(q, k, (((1,), (1,)), ((), ())),
                            preferred_element_type=jnp.float32) * scale
    s = s - jnp.max(s, axis=-1, keepdims=True)
    p = jnp.exp(s)
    p = p / jnp.sum(p, axis=-1, keepdims=True)
    o = jnp.dot(p.astype(v.dtype), v, preferred_element_type=jnp.float32)
    o_ref[...] = o.astype(o_ref.dtype)


def mha_pallas(q, k, v, *, scale):
    """q: (B, H, Nq, hd), k/v: (B, H, Nk, hd) -> (B, H, Nq, hd)."""
    b, h, nq, hd = q.shape
    nk = k.shape[2]
    qf = q.reshape(b * h, nq, hd)
    kf = k.reshape(b * h, nk, hd)
    vf = v.reshape(b * h, nk, hd)
    out = pl.pallas_call(
        partial(_attn_kernel, scale=scale),
        out_shape=jax.ShapeDtypeStruct((b * h, nq, hd), q.dtype),
        grid_spec=pltpu.PrefetchScalarGridSpec(
            num_scalar_prefetch=0,
            grid=(b * h,),
            in_specs=[
                pl.BlockSpec((None, nq, hd), lambda i: (i, 0, 0)),
                pl.BlockSpec((None, nk, hd), lambda i: (i, 0, 0)),
                pl.BlockSpec((None, nk, hd), lambda i: (i, 0, 0)),
            ],
            out_specs=pl.BlockSpec((None, nq, hd), lambda i: (i, 0, 0)),
        ),
        compiler_params=pltpu.CompilerParams(dimension_semantics=("parallel",)),
    )(qf, kf, vf)
    return out.reshape(b, h, nq, hd)


# ----------------------------------------------------------------------------
# Muti_Modal forward (composition of the kernels above)
# ----------------------------------------------------------------------------
def _self_attention(x, p, *, num_heads):
    b, n, c = x.shape
    hd = c // num_heads
    qkv = linear_pallas(x, p["qkv"]["w"], p["qkv"]["b"]).reshape(b, n, 3, num_heads, hd)
    qkv = jnp.transpose(qkv, (2, 0, 3, 1, 4))
    q, k, v = qkv[0], qkv[1], qkv[2]
    o = mha_pallas(q, k, v, scale=hd ** -0.5)
    o = jnp.transpose(o, (0, 2, 1, 3)).reshape(b, n, c)
    return linear_pallas(o, p["proj"]["w"], p["proj"]["b"])


def _block(x, p, *, num_heads):
    h = layernorm_pallas(x, p["norm1"]["g"], p["norm1"]["b"], eps=1e-5)
    x = x + _self_attention(h, p, num_heads=num_heads)
    h = layernorm_pallas(x, p["norm2"]["g"], p["norm2"]["b"], eps=1e-5)
    x = x + mlp_pallas(h, p["fc1"]["w"], p["fc1"]["b"], p["fc2"]["w"], p["fc2"]["b"])
    return x


def _fusion_block(x, clinic, p, *, num_heads):
    x = layernorm_pallas(x, p["image_norm"]["g"], p["image_norm"]["b"], eps=1e-5)
    clinic = layernorm_pallas(clinic, p["clinic_norm"]["g"], p["clinic_norm"]["b"], eps=1e-5)
    b, nx, c = x.shape
    hd = c // num_heads
    kv = linear_pallas(x, p["kv"]["w"], p["kv"]["b"]).reshape(b, nx, 2, num_heads, hd)
    kv = jnp.transpose(kv, (2, 0, 3, 1, 4))
    k, v = kv[0], kv[1]
    nc = clinic.shape[1]
    q = linear_pallas(clinic, p["q"]["w"], p["q"]["b"]).reshape(b, nc, num_heads, hd)
    q = jnp.transpose(q, (0, 2, 1, 3))
    o = mha_pallas(q, k, v, scale=hd ** -0.5)
    o = jnp.transpose(o, (0, 2, 1, 3)).reshape(b, nc, c)
    o = linear_pallas(o, p["proj"]["w"], p["proj"]["b"])
    h = layernorm_pallas(o, p["norm"]["g"], p["norm"]["b"], eps=1e-5)
    return o + mlp_pallas(h, p["fc1"]["w"], p["fc1"]["b"], p["fc2"]["w"], p["fc2"]["b"])


def _attention_pool(feat2d, p):
    a = linear_pallas(feat2d, p["l1"]["w"], p["l1"]["b"], act="tanh")   # (N, 32)
    a = linear_pallas(a, p["l2"]["w"], p["l2"]["b"])                    # (N, 1)
    a_t = a.reshape(1, -1)                                              # (1, N)
    # torch.mm(A, feat): reuse the linear kernel with a zero bias.
    zero_b = jnp.zeros((feat2d.shape[1],), feat2d.dtype)
    return linear_pallas(a_t, feat2d, zero_b)                           # (1, C)


def muti_modal_forward(params, x, clinic, *, num_heads=4):
    # Clinic_Branch: transpose, Linear(1 -> dim), dropout (identity in eval)
    c = linear_pallas(jnp.transpose(clinic, (1, 0)),
                      params["clinic_embed"]["w"], params["clinic_embed"]["b"])[None]
    # Image_Branch: Linear(patch_dim -> dim), dropout (identity in eval)
    xi = linear_pallas(x, params["image_embed"]["w"], params["image_embed"]["b"])
    # co_MHA cross-attention fusion, then the two transformer blocks
    image_feat = _fusion_block(xi, c, params["fusion"], num_heads=num_heads)
    image_feat = _block(image_feat, params["image_block"], num_heads=num_heads)
    clinic_feat = _block(c, params["clinic_block"], num_heads=num_heads)
    # gated-attention pooling heads
    img_vec = _attention_pool(image_feat[0], params["image_pool"])      # (1, dim)
    cli_vec = _attention_pool(clinic_feat[0], params["clinic_pool"])    # (1, dim)
    feat = jnp.concatenate([cli_vec[0], img_vec[0]])[None]              # (1, 2*dim)
    feat = layernorm_pallas(feat, params["norm"]["g"], params["norm"]["b"], eps=1e-6)
    return linear_pallas(feat, params["head"]["w"], params["head"]["b"], act="sigmoid")


# ----------------------------------------------------------------------------
# deterministic parameter init (mimics nn.Linear / nn.LayerNorm defaults)
# ----------------------------------------------------------------------------
def init_muti_modal_params(key, *, patch_dim=512, dim=64, mlp_ratio=2, num_classes=1):
    keys = iter(jax.random.split(key, 64))

    def lin(fan_in, fan_out):
        lim = 1.0 / math.sqrt(fan_in)
        w = jax.random.uniform(next(keys), (fan_in, fan_out), jnp.float32, -lim, lim)
        b = jax.random.uniform(next(keys), (fan_out,), jnp.float32, -lim, lim)
        return {"w": w, "b": b}

    def ln(c):
        return {"g": jnp.ones((c,), jnp.float32), "b": jnp.zeros((c,), jnp.float32)}

    hidden = dim * mlp_ratio

    def block():
        return {"norm1": ln(dim), "qkv": lin(dim, dim * 3), "proj": lin(dim, dim),
                "norm2": ln(dim), "fc1": lin(dim, hidden), "fc2": lin(hidden, dim)}

    return {
        "clinic_embed": lin(1, dim),
        "image_embed": lin(patch_dim, dim),
        "fusion": {"image_norm": ln(dim), "clinic_norm": ln(dim),
                   "kv": lin(dim, dim * 2), "q": lin(dim, dim), "proj": lin(dim, dim),
                   "norm": ln(dim), "fc1": lin(dim, hidden), "fc2": lin(hidden, dim)},
        "image_block": block(),
        "clinic_block": block(),
        "image_pool": {"l1": lin(dim, 32), "l2": lin(32, 1)},
        "clinic_pool": {"l1": lin(dim, 32), "l2": lin(32, 1)},
        "norm": ln(2 * dim),
        "head": lin(2 * dim, num_classes),
    }


# ----------------------------------------------------------------------------
# pure-JAX reference (same semantics as the PyTorch forward in eval mode)
# ----------------------------------------------------------------------------
def _ref_ln(x, g, b, eps):
    mu = jnp.mean(x, -1, keepdims=True)
    var = jnp.mean((x - mu) ** 2, -1, keepdims=True)
    return (x - mu) / jnp.sqrt(var + eps) * g + b


def _ref_mlp(x, p):
    h = x @ p["fc1"]["w"] + p["fc1"]["b"]
    h = 0.5 * h * (1.0 + jax.lax.erf(h / math.sqrt(2.0)))
    return h @ p["fc2"]["w"] + p["fc2"]["b"]


def _ref_mha(q, k, v, scale):
    s = jnp.einsum("bhqd,bhkd->bhqk", q, k) * scale
    return jnp.einsum("bhqk,bhkd->bhqd", jax.nn.softmax(s, axis=-1), v)


def _ref_self_attn(x, p, nh):
    b, n, c = x.shape
    hd = c // nh
    qkv = (x @ p["qkv"]["w"] + p["qkv"]["b"]).reshape(b, n, 3, nh, hd)
    qkv = jnp.transpose(qkv, (2, 0, 3, 1, 4))
    o = _ref_mha(qkv[0], qkv[1], qkv[2], hd ** -0.5)
    o = jnp.transpose(o, (0, 2, 1, 3)).reshape(b, n, c)
    return o @ p["proj"]["w"] + p["proj"]["b"]


def _ref_block(x, p, nh):
    x = x + _ref_self_attn(_ref_ln(x, p["norm1"]["g"], p["norm1"]["b"], 1e-5), p, nh)
    x = x + _ref_mlp(_ref_ln(x, p["norm2"]["g"], p["norm2"]["b"], 1e-5), p)
    return x


def _ref_fusion(x, c, p, nh):
    x = _ref_ln(x, p["image_norm"]["g"], p["image_norm"]["b"], 1e-5)
    c = _ref_ln(c, p["clinic_norm"]["g"], p["clinic_norm"]["b"], 1e-5)
    b, nx, dim = x.shape
    hd = dim // nh
    kv = (x @ p["kv"]["w"] + p["kv"]["b"]).reshape(b, nx, 2, nh, hd)
    kv = jnp.transpose(kv, (2, 0, 3, 1, 4))
    nc = c.shape[1]
    q = jnp.transpose((c @ p["q"]["w"] + p["q"]["b"]).reshape(b, nc, nh, hd), (0, 2, 1, 3))
    o = _ref_mha(q, kv[0], kv[1], hd ** -0.5)
    o = jnp.transpose(o, (0, 2, 1, 3)).reshape(b, nc, dim)
    o = o @ p["proj"]["w"] + p["proj"]["b"]
    return o + _ref_mlp(_ref_ln(o, p["norm"]["g"], p["norm"]["b"], 1e-5), p)


def _ref_pool(f, p):
    a = jnp.tanh(f @ p["l1"]["w"] + p["l1"]["b"]) @ p["l2"]["w"] + p["l2"]["b"]
    return a.T @ f


def _ref_forward(params, x, clinic, nh=4):
    c = (clinic.T @ params["clinic_embed"]["w"] + params["clinic_embed"]["b"])[None]
    xi = x @ params["image_embed"]["w"] + params["image_embed"]["b"]
    imf = _ref_fusion(xi, c, params["fusion"], nh)
    imf = _ref_block(imf, params["image_block"], nh)
    clf = _ref_block(c, params["clinic_block"], nh)
    iv = _ref_pool(imf[0], params["image_pool"])
    cv = _ref_pool(clf[0], params["clinic_pool"])
    feat = jnp.concatenate([cv[0], iv[0]])[None]
    feat = _ref_ln(feat, params["norm"]["g"], params["norm"]["b"], 1e-6)
    return jax.nn.sigmoid(feat @ params["head"]["w"] + params["head"]["b"])


# ----------------------------------------------------------------------------
if __name__ == "__main__":
    key = jax.random.PRNGKey(0)
    kp, kx, kc = jax.random.split(key, 3)

    # small shapes consistent with Muti_Modal defaults:
    #   image: (B=1, N_patches=10, patch_dim=512); clinic: (1, clinic_dim=16)
    B, N_PATCHES, PATCH_DIM = 1, 10, 512
    CLINIC_DIM, DIM, NUM_HEADS = 16, 64, 4

    params = init_muti_modal_params(kp, patch_dim=PATCH_DIM, dim=DIM,
                                    mlp_ratio=2, num_classes=1)
    x = jax.random.normal(kx, (B, N_PATCHES, PATCH_DIM), jnp.float32)
    clinic = jax.random.normal(kc, (B, CLINIC_DIM), jnp.float32)

    pred = muti_modal_forward(params, x, clinic, num_heads=NUM_HEADS)
    jax.block_until_ready(pred)

    pred_ref = _ref_forward(params, x, clinic, NUM_HEADS)
    assert pred.shape == (1, 1), pred.shape
    assert jnp.allclose(pred, pred_ref, atol=5e-3, rtol=5e-3), (pred, pred_ref)

    print("KERNEL_OK")
</pallas_src>

<mosaic_0001>
module attributes {stable_mosaic.version = 11 : i64} {
  func.func @_linear_kernel(%arg0: i32, %arg1: memref<16x1xf32, #tpu.memory_space<vmem>>, %arg2: memref<1x64xf32, #tpu.memory_space<vmem>>, %arg3: memref<1x64xf32, #tpu.memory_space<vmem>>, %arg4: memref<16x64xf32, #tpu.memory_space<vmem>>) attributes {dimension_semantics = [#tpu.dimension_semantics<parallel>], iteration_bounds = array<i64: 1>, scalar_prefetch = 0 : i64, scratch_operands = 0 : i64, tpu.core_type = #tpu.core_type<tc>, window_params = [{transform_indices = @transform_0, window_bounds = array<i64: 16, 1>}, {pipeline_mode = #tpu.pipeline_mode<synchronous>, transform_indices = @transform_1, window_bounds = array<i64: 1, 64>}, {pipeline_mode = #tpu.pipeline_mode<synchronous>, transform_indices = @transform_2, window_bounds = array<i64: 1, 64>}, {transform_indices = @transform_3, window_bounds = array<i64: 16, 64>}]} {
    %c0 = arith.constant 0 : index
    %c0_0 = arith.constant 0 : index
    %0 = vector.load %arg1[%c0, %c0_0] : memref<16x1xf32, #tpu.memory_space<vmem>>, vector<16x1xf32>
    %c0_1 = arith.constant 0 : index
    %c0_2 = arith.constant 0 : index
    %1 = vector.load %arg2[%c0_1, %c0_2] : memref<1x64xf32, #tpu.memory_space<vmem>>, vector<1x64xf32>
    %2 = vector.broadcast %0 : vector<16x1xf32> to vector<16x64xf32>
    %3 = vector.broadcast %1 : vector<1x64xf32> to vector<16x64xf32>
    %4 = arith.mulf %2, %3 : vector<16x64xf32>
    %c0_3 = arith.constant 0 : index
    %c0_4 = arith.constant 0 : index
    %5 = vector.load %arg3[%c0_3, %c0_4] : memref<1x64xf32, #tpu.memory_space<vmem>>, vector<1x64xf32>
    %6 = vector.broadcast %5 : vector<1x64xf32> to vector<16x64xf32>
    %7 = arith.addf %4, %6 : vector<16x64xf32>
    %c0_5 = arith.constant 0 : index
    %c0_6 = arith.constant 0 : index
    %8 = vector.load %arg4[%c0_5, %c0_6] : memref<16x64xf32, #tpu.memory_space<vmem>>, vector<16x64xf32>
    tpu.vector_store %arg4[%c0_5, %c0_6], %7 {strides = array<i32>} : memref<16x64xf32, #tpu.memory_space<vmem>>, vector<16x64xf32>,
    return
  }
  func.func @transform_0(%arg0: i32) -> (i32, i32) {
    %c0_i32 = arith.constant 0 : i32
    %c0_i32_0 = arith.constant 0 : i32
    return %arg0, %c0_i32 : i32, i32
  }
  func.func @transform_1(%arg0: i32) -> (i32, i32) {
    %c0_i32 = arith.constant 0 : i32
    %c0_i32_0 = arith.constant 0 : i32
    %c0_i32_1 = arith.constant 0 : i32
    return %c0_i32, %c0_i32_0 : i32, i32
  }
  func.func @transform_2(%arg0: i32) -> (i32, i32) {
    %c0_i32 = arith.constant 0 : i32
    %c0_i32_0 = arith.constant 0 : i32
    %c0_i32_1 = arith.constant 0 : i32
    return %c0_i32, %c0_i32_0 : i32, i32
  }
  func.func @transform_3(%arg0: i32) -> (i32, i32) {
    %c0_i32 = arith.constant 0 : i32
    %c0_i32_0 = arith.constant 0 : i32
    return %arg0, %c0_i32 : i32, i32
  }
}

</mosaic_0001>

<llo_original>
// kernel: tpu_custom_call.1
$region0: #{tpu_custom_call.1}
  #allocation0 [shape = 'u32[]', space=smem, size = 0x4, offset = 0x4, fixed_abs, tag = 'smem constant byte address 0x4 - core index']
  #allocation1 [shape = 'u32[144,128]{1,0:T(1,128)}', space=vmem, size = 0x12000, scoped, tag = 'internal scratch']
  %s0 = inlined_call_operand.vmem [shape: f32[16,1], index: 0, kind: input, shape index: {}]
  %s1 = inlined_call_operand.vmem [shape: f32[1,64], index: 1, kind: input, shape index: {}]
  %s2 = inlined_call_operand.vmem [shape: f32[1,64], index: 2, kind: input, shape index: {}]
  %s3 = inlined_call_operand.hbm [shape: f32[16,64], index: 3, kind: output, shape index: {}]
  %s4 = sld [smem:[#allocation0]]
  $region22: #{tpu_custom_call.1} parent=0
    _
  %s6 = ssub.s32 1, %s4
  %s7 = scalar_select 0, %s6, %s4
  $region1: #{tpu_custom_call.1} parent=0
    #allocation2 [shape = 'u8[8192]{0}', space=vmem, size = 0x2000, scoped, tag = 'output window, operand 0, single buffered']
    #allocation3 [shape = 's32[1]{0}', space=sflag, size = 0x4, scoped, tag = 'scoped memory for tpu_custom_call.1']
    %8 = vsyncpa [#allocation3], 0
    // Predicated region
    $region2: #{tpu_custom_call.1} parent=1 // pred_check
      _
    $region3: #{tpu_custom_call.1} parent=1 // pred_check_branch
      %10 = sbr.rel (0) target = $region5
    $region4: #{tpu_custom_call.1} parent=1 // pred_region
      _
    $region5: #{tpu_custom_call.1} parent=1 // pred_fallthru
      _
    // Predicated region
    $region6: #{tpu_custom_call.1} parent=1 // pred_check
      _
    $region7: #{tpu_custom_call.1} parent=1 // pred_check_branch
      %12 = sbr.rel (0) target = $region9
    $region8: #{tpu_custom_call.1} parent=1 // pred_region
      _
    $region9: #{tpu_custom_call.1} parent=1 // pred_fallthru
      _
    // Predicated region
    $region10: #{tpu_custom_call.1} parent=1 // pred_check
      _
    $region11: #{tpu_custom_call.1} parent=1 // pred_check_branch
      %14 = sbr.rel (0) target = $region13
    $region12: #{tpu_custom_call.1} parent=1 // pred_region
      _
    $region13: #{tpu_custom_call.1} parent=1 // pred_fallthru
      _
    %v15 = vld [vmem:[%s0] sm:$0xff]
    %v16 = vld [vmem:[%s0 + $0x8] sm:$0xff]
    %v17 = vld [vmem:[%s1] sm:$0x1]
    %19 = vset.pattern.permute.xlu0 0
    %20 = vperm.xlu0 %19, %v15
    %v21 = vpop.permute.xlu0 %20
    %24 = vset.pattern.permute.xlu0 0
    %25 = vperm.xlu0 %24, %v16
    %v26 = vpop.permute.xlu0 %25
    %v29 = vlaneseq
    %v30 = vshrl.u32 %v29, 7
    %v31 = vsub.s32 0, %v30
    %v32 = vrot.slane %v17, %v31
    %v34 = vmul.f32 %v21, %v32
    %v35 = vmul.f32 %v26, %v32
    %v36 = vld [vmem:[%s2] sm:$0x1]
    %v38 = vlaneseq
    %v39 = vshrl.u32 %v38, 7
    %v40 = vsub.s32 0, %v39
    %v41 = vrot.slane %v36, %v40
    %v43 = vadd.f32 %v34, %v41
    %v44 = vadd.f32 %v35, %v41
    %vm45 = vcmask 523264
    %46 = vst.msk [vmem:[#allocation2] sm:$0xff] %vm45, %v43
    %47 = vst.msk [vmem:[#allocation2 + $0x8] sm:$0xff] %vm45, %v44
    // Predicated region
    $region14: #{tpu_custom_call.1} parent=1 // pred_check
      _
    $region15: #{tpu_custom_call.1} parent=1 // pred_check_branch
      %49 = sbr.rel (0) target = $region17
    $region16: #{tpu_custom_call.1} parent=1 // pred_region
      %s51 = ssub.s32 256, 256
      %52 = vsyncadd [#allocation3], %s51
      %s53 = sshll.u32 [#allocation2], 4
      %s54 = int_to_ptr.vmem [resolvable:$true] %s53
      %59 = dma.vmem_to_hbm [thread:$0]  %s54, 256, %s3, [#allocation3], 128, 128, 8
    $region17: #{tpu_custom_call.1} parent=1 // pred_fallthru
      _
    // Predicated region
    $region18: #{tpu_custom_call.1} parent=1 // pred_check
      _
    $region19: #{tpu_custom_call.1} parent=1 // pred_check_branch
      %61 = sbr.rel (0) target = $region21
    $region20: #{tpu_custom_call.1} parent=1 // pred_region
      %62 = dma.done [#allocation3], 256
    $region21: #{tpu_custom_call.1} parent=1 // pred_fallthru
      _
    %63 = vsyncpa [#allocation3], 1

</llo_original>
